<compile_context>
chip_gen: v7x
topology: tpu7x:2x2x1
jax: 0.10.0
libtpu: 0.0.40
codegen_flags: <defaults>
</compile_context>

<pallas_src>
import functools

import jax
import jax.numpy as jnp
from jax import lax
from jax.experimental import pallas as pl
from jax.experimental.pallas import tpu as pltpu


def _round_up(x, m):
    return ((x + m - 1) // m) * m


def _resident(block_shape):
    """Grid-invariant, single-buffered BlockSpec (block index always 0)."""
    zeros = (0,) * len(block_shape)
    return pl.BlockSpec(block_shape, lambda *_: zeros,
                        pipeline_mode=pl.Buffered(1))


def _gru_recurrence_kernel(x_ref, w_ih_ref, w_hh_ref, bias_x_ref, b_hn_ref,
                           h_ref, *, t_blk, seq_len, batch, hidden_p):
    """One T-chunk of the GRU recurrence (h carried in the resident out block).

    x_ref:      (t_blk, Bp, D)  bf16, streamed per chunk (double-buffered)
    w_ih_ref:   (D, 3*Hp)       bf16, resident   gate order [r | z | n]
    w_hh_ref:   (Hp, 3*Hp)      bf16, resident
    bias_x_ref: (1, 3*Hp)       f32  = [b_ir+b_hr | b_iz+b_hz | b_in]
    b_hn_ref:   (1, Hp)         f32  (must stay inside the r*(...) term)
    h_ref:      (Bp, Hp)        f32  output block, resident accumulator
    """
    Hp = hidden_p
    chunk = pl.program_id(0)

    @pl.when(chunk == 0)
    def _():
        h_ref[...] = jnp.zeros_like(h_ref)

    # Time-independent input path for this chunk: one fused MXU matmul,
    # hoisted off the serial per-step dependency chain.
    D = x_ref.shape[-1]
    x_chunk = x_ref[...].reshape(t_blk * batch, D)                      # bf16
    gx = jnp.dot(x_chunk, w_ih_ref[...],
                 preferred_element_type=jnp.float32) + bias_x_ref[...]  # f32
    gx = gx.reshape(t_blk, batch, 3 * Hp)

    w_hh = w_hh_ref[...]                                                # bf16
    b_hn = jnp.broadcast_to(b_hn_ref[...], (batch, Hp))                 # hoisted

    h = h_ref[...]                                                      # (Bp, Hp) f32
    for t in range(t_blk):                                              # bounded unroll
        gx_t = gx[t]                                                    # static slice
        gh = jnp.dot(h.astype(jnp.bfloat16), w_hh,
                     preferred_element_type=jnp.float32)                # (Bp, 3Hp)

        i_r, i_z, i_n = gx_t[:, :Hp], gx_t[:, Hp:2 * Hp], gx_t[:, 2 * Hp:]
        h_r, h_z, h_n = gh[:, :Hp], gh[:, Hp:2 * Hp], gh[:, 2 * Hp:]

        r = jax.nn.sigmoid(i_r + h_r)
        z = jax.nn.sigmoid(i_z + h_z)
        n = jnp.tanh(i_n + r * (h_n + b_hn))
        h_new = (1.0 - z) * n + z * h

        # Mask out time-padding steps (when T is not a multiple of t_blk).
        h = jnp.where(chunk * t_blk + t < seq_len, h_new, h)

    h_ref[...] = h


def _proj_kernel(h_ref, w_out_ref, b_out_ref, logits_ref):
    """One V-tile of the output projection (dropout is identity in eval mode)."""
    logits_ref[...] = (
        jnp.dot(h_ref[...].astype(jnp.bfloat16), w_out_ref[...],
                preferred_element_type=jnp.float32)
        + b_out_ref[...]
    )


def gru_lyrics_forward(tokens, params, *, t_blk=8, v_blk=128):
    """tokens: (B, T) int32 token indices. Returns (logits (B,V), h (1,B,H))."""
    emb = params["embedding"]          # (vocab, D)  frozen word2vec matrix
    w_ih = params["w_ih"]              # (3, D, H)   gate order [r, z, n]
    w_hh = params["w_hh"]              # (3, H, H)
    b_ih = params["b_ih"]              # (3, 1, H)
    b_hh = params["b_hh"]              # (3, 1, H)
    w_out = params["w_out"]            # (H, V)
    b_out = params["b_out"]            # (1, V)

    B, T = tokens.shape
    D = emb.shape[1]
    H = w_hh.shape[-1]
    V = w_out.shape[-1]

    Bp = _round_up(B, 8)               # sublane tile
    Hp = _round_up(H, 128)             # lane-aligned per-gate extent
    Vp = _round_up(V, v_blk)
    t_blk = max(1, min(t_blk, T))
    num_chunks = pl.cdiv(T, t_blk)
    Tp = num_chunks * t_blk

    # --- Fuse + pad weights (padded lanes zero so padded h stays zero). ---
    w_ih_p = jnp.pad(w_ih, ((0, 0), (0, 0), (0, Hp - H)))
    w_hh_p = jnp.pad(w_hh, ((0, 0), (0, Hp - H), (0, Hp - H)))
    w_ih_f = jnp.transpose(w_ih_p, (1, 0, 2)).reshape(D, 3 * Hp).astype(jnp.bfloat16)
    w_hh_f = jnp.transpose(w_hh_p, (1, 0, 2)).reshape(Hp, 3 * Hp).astype(jnp.bfloat16)

    b_ih_p = jnp.pad(b_ih.reshape(3, H), ((0, 0), (0, Hp - H)))
    b_hh_p = jnp.pad(b_hh.reshape(3, H), ((0, 0), (0, Hp - H)))
    # Fold b_hr, b_hz into the x-side bias; b_hn must stay inside r*(...).
    bias_x = jnp.concatenate([b_ih_p[:2] + b_hh_p[:2], b_ih_p[2:3]], axis=0)
    bias_x = bias_x.reshape(1, 3 * Hp).astype(jnp.float32)
    b_hn = b_hh_p[2:3].astype(jnp.float32)                              # (1, Hp)

    w_out_p = jnp.pad(w_out, ((0, Hp - H), (0, Vp - V))).astype(jnp.bfloat16)
    b_out_p = jnp.pad(b_out.reshape(1, V), ((0, 0), (0, Vp - V))).astype(jnp.float32)

    # --- Time-major, padded, bf16 embedded inputs (gather stays in XLA). ---
    x = jnp.take(emb, tokens, axis=0).astype(jnp.float32)               # (B, T, D)
    x_tm = jnp.transpose(x, (1, 0, 2))                                  # (T, B, D)
    x_tm = jnp.pad(x_tm, ((0, Tp - T), (0, Bp - B), (0, 0))).astype(jnp.bfloat16)

    # --- 1) Serial GRU recurrence, streamed over T-chunks ("arbitrary"). ---
    rec_kernel = functools.partial(
        _gru_recurrence_kernel, t_blk=t_blk, seq_len=T, batch=Bp, hidden_p=Hp)
    h_p = pl.pallas_call(
        rec_kernel,
        out_shape=jax.ShapeDtypeStruct((Bp, Hp), jnp.float32),
        grid_spec=pltpu.PrefetchScalarGridSpec(
            num_scalar_prefetch=0,
            grid=(num_chunks,),
            in_specs=[
                pl.BlockSpec((t_blk, Bp, D), lambda c: (c, 0, 0)),   # streamed x chunk
                _resident((D, 3 * Hp)),                              # w_ih fused
                _resident((Hp, 3 * Hp)),                             # w_hh fused
                _resident((1, 3 * Hp)),                              # x-side bias
                _resident((1, Hp)),                                  # b_hn
            ],
            out_specs=pl.BlockSpec((Bp, Hp), lambda c: (0, 0)),      # resident h carry
        ),
        compiler_params=pltpu.CompilerParams(
            dimension_semantics=("arbitrary",)),
    )(x_tm, w_ih_f, w_hh_f, bias_x, b_hn)

    # --- 2) Output projection, streamed over V-tiles ("parallel"). ---
    logits_p = pl.pallas_call(
        _proj_kernel,
        out_shape=jax.ShapeDtypeStruct((Bp, Vp), jnp.float32),
        grid_spec=pltpu.PrefetchScalarGridSpec(
            num_scalar_prefetch=0,
            grid=(Vp // v_blk,),
            in_specs=[
                _resident((Bp, Hp)),                                 # h_last
                pl.BlockSpec((Hp, v_blk), lambda j: (0, j)),         # w_out tile
                pl.BlockSpec((1, v_blk), lambda j: (0, j)),          # b_out tile
            ],
            out_specs=pl.BlockSpec((Bp, v_blk), lambda j: (0, j)),
        ),
        compiler_params=pltpu.CompilerParams(
            dimension_semantics=("parallel",)),
    )(h_p, w_out_p, b_out_p)

    logits = logits_p[:B, :V]              # drop batch / vocab padding
    h = h_p[:B, :H][None, :, :]            # (num_layers=1, B, H), matches PyTorch
    return logits, h


def _reference_forward(tokens, params):
    """Pure-JAX f32 reference of the same forward pass (correctness check)."""
    emb = params["embedding"]
    w_ih, w_hh = params["w_ih"], params["w_hh"]
    b_ih, b_hh = params["b_ih"], params["b_hh"]
    w_out, b_out = params["w_out"], params["b_out"]

    x = jnp.take(emb, tokens, axis=0).astype(jnp.float32)   # (B, T, D)
    B, T, D = x.shape
    H = w_hh.shape[-1]

    def step(h_prev, x_t):
        i_r = x_t @ w_ih[0] + b_ih[0]
        i_z = x_t @ w_ih[1] + b_ih[1]
        i_n = x_t @ w_ih[2] + b_ih[2]
        h_r = h_prev @ w_hh[0] + b_hh[0]
        h_z = h_prev @ w_hh[1] + b_hh[1]
        h_n = h_prev @ w_hh[2] + b_hh[2]
        r = jax.nn.sigmoid(i_r + h_r)
        z = jax.nn.sigmoid(i_z + h_z)
        n = jnp.tanh(i_n + r * h_n)
        h_new = (1.0 - z) * n + z * h_prev
        return h_new, h_new

    h0 = jnp.zeros((B, H), jnp.float32)
    h_last, _ = lax.scan(step, h0, jnp.transpose(x, (1, 0, 2)))
    logits = h_last @ w_out + b_out
    return logits, h_last[None]


if __name__ == "__main__":
    # Small shapes consistent with the module: seq=8, batch=2,
    # input_size (embedding dim) = 16, hidden_size = 32, vocab_size = 128.
    B, T, D, H, V = 2, 8, 16, 32, 128

    key = jax.random.PRNGKey(0)
    keys = jax.random.split(key, 8)

    params = {
        # frozen word2vec embedding matrix (vocab, input_size)
        "embedding": jax.random.normal(keys[0], (V, D), jnp.float32),
        "w_ih": 0.1 * jax.random.normal(keys[1], (3, D, H), jnp.float32),
        "w_hh": 0.1 * jax.random.normal(keys[2], (3, H, H), jnp.float32),
        "b_ih": 0.1 * jax.random.normal(keys[3], (3, 1, H), jnp.float32),
        "b_hh": 0.1 * jax.random.normal(keys[4], (3, 1, H), jnp.float32),
        "w_out": 0.1 * jax.random.normal(keys[5], (H, V), jnp.float32),
        "b_out": 0.1 * jax.random.normal(keys[6], (1, V), jnp.float32),
    }
    tokens = jax.random.randint(keys[7], (B, T), 0, V, dtype=jnp.int32)

    # t_blk=4 -> 2 streamed T-chunks, exercising the resident-h carry.
    logits, h = gru_lyrics_forward(tokens, params, t_blk=4)
    logits = jax.block_until_ready(logits)
    h = jax.block_until_ready(h)

    ref_logits, ref_h = _reference_forward(tokens, params)
    assert logits.shape == (B, V) and h.shape == (1, B, H)
    # bf16 MXU operands (f32 accumulation) vs. f32 reference -> loose tolerance.
    assert jnp.allclose(logits, ref_logits, atol=5e-2, rtol=5e-2)
    assert jnp.allclose(h, ref_h, atol=5e-2, rtol=5e-2)

    print("KERNEL_OK")
</pallas_src>

<mosaic_0001>
module attributes {stable_mosaic.version = 11 : i64} {
  func.func @_gru_recurrence_kernel(%arg0: i32, %arg1: memref<4x8x16xbf16, #tpu.memory_space<vmem>>, %arg2: memref<16x384xbf16, #tpu.memory_space<vmem>>, %arg3: memref<128x384xbf16, #tpu.memory_space<vmem>>, %arg4: memref<1x384xf32, #tpu.memory_space<vmem>>, %arg5: memref<1x128xf32, #tpu.memory_space<vmem>>, %arg6: memref<8x128xf32, #tpu.memory_space<vmem>>) attributes {dimension_semantics = [#tpu.dimension_semantics<arbitrary>], iteration_bounds = array<i64: 2>, scalar_prefetch = 0 : i64, scratch_operands = 0 : i64, tpu.core_type = #tpu.core_type<tc>, window_params = [{transform_indices = @transform_0, window_bounds = array<i64: 4, 8, 16>}, {pipeline_mode = #tpu.pipeline_mode<synchronous>, transform_indices = @transform_1, window_bounds = array<i64: 16, 384>}, {pipeline_mode = #tpu.pipeline_mode<synchronous>, transform_indices = @transform_2, window_bounds = array<i64: 128, 384>}, {pipeline_mode = #tpu.pipeline_mode<synchronous>, transform_indices = @transform_3, window_bounds = array<i64: 1, 384>}, {pipeline_mode = #tpu.pipeline_mode<synchronous>, transform_indices = @transform_4, window_bounds = array<i64: 1, 128>}, {pipeline_mode = #tpu.pipeline_mode<synchronous>, transform_indices = @transform_5, window_bounds = array<i64: 8, 128>}]} {
    %c0_i32 = arith.constant 0 : i32
    %0 = arith.cmpi eq, %arg0, %c0_i32 : i32
    %1 = arith.extui %0 : i1 to i32
    %c0_i32_0 = arith.constant 0 : i32
    %2 = arith.cmpi ne, %1, %c0_i32_0 : i32
    scf.if %2 {
      %cst_38 = arith.constant 0.000000e+00 : f32
      %157 = vector.broadcast %cst_38 : f32 to vector<8x128xf32>
      %c0_39 = arith.constant 0 : index
      %c0_40 = arith.constant 0 : index
      %158 = vector.load %arg6[%c0_39, %c0_40] : memref<8x128xf32, #tpu.memory_space<vmem>>, vector<8x128xf32>
      tpu.vector_store %arg6[%c0_39, %c0_40], %157 {strides = array<i32>} : memref<8x128xf32, #tpu.memory_space<vmem>>, vector<8x128xf32>,
    } else {
    }
    %c0 = arith.constant 0 : index
    %c0_1 = arith.constant 0 : index
    %c0_2 = arith.constant 0 : index
    %3 = vector.load %arg1[%c0, %c0_1, %c0_2] : memref<4x8x16xbf16, #tpu.memory_space<vmem>>, vector<4x8x16xbf16>
    %4 = vector.shape_cast %3 : vector<4x8x16xbf16> to vector<32x16xbf16>
    %c0_3 = arith.constant 0 : index
    %c0_4 = arith.constant 0 : index
    %5 = vector.load %arg2[%c0_3, %c0_4] : memref<16x384xbf16, #tpu.memory_space<vmem>>, vector<16x384xbf16>
    %cst = arith.constant dense<0.000000e+00> : vector<32x384xf32>
    %6 = tpu.matmul %4, %5, %cst {dimension_numbers = #tpu.dot_dimension_numbers<[1], [0], [0], [1], [0, 0, 1, 1], [], []>} : vector<32x16xbf16>, vector<16x384xbf16>, vector<32x384xf32> -> vector<32x384xf32>
    %c0_5 = arith.constant 0 : index
    %c0_6 = arith.constant 0 : index
    %7 = vector.load %arg4[%c0_5, %c0_6] : memref<1x384xf32, #tpu.memory_space<vmem>>, vector<1x384xf32>
    %8 = vector.broadcast %7 : vector<1x384xf32> to vector<32x384xf32>
    %9 = arith.addf %6, %8 : vector<32x384xf32>
    %10 = vector.shape_cast %9 : vector<32x384xf32> to vector<4x8x384xf32>
    %c0_7 = arith.constant 0 : index
    %c0_8 = arith.constant 0 : index
    %11 = vector.load %arg3[%c0_7, %c0_8] : memref<128x384xbf16, #tpu.memory_space<vmem>>, vector<128x384xbf16>
    %c0_9 = arith.constant 0 : index
    %c0_10 = arith.constant 0 : index
    %12 = vector.load %arg5[%c0_9, %c0_10] : memref<1x128xf32, #tpu.memory_space<vmem>>, vector<1x128xf32>
    %13 = vector.shape_cast %12 : vector<1x128xf32> to vector<1x128xf32>
    %14 = vector.broadcast %13 : vector<1x128xf32> to vector<8x128xf32>
    %c0_11 = arith.constant 0 : index
    %c0_12 = arith.constant 0 : index
    %15 = vector.load %arg6[%c0_11, %c0_12] : memref<8x128xf32, #tpu.memory_space<vmem>>, vector<8x128xf32>
    %16 = vector.extract_strided_slice %10 {offsets = [0, 0, 0], sizes = [1, 8, 384], strides = [1, 1, 1]} : vector<4x8x384xf32> to vector<1x8x384xf32>
    %17 = vector.shape_cast %16 : vector<1x8x384xf32> to vector<8x384xf32>
    %18 = arith.truncf %15 : vector<8x128xf32> to vector<8x128xbf16>
    %cst_13 = arith.constant dense<0.000000e+00> : vector<8x384xf32>
    %19 = tpu.matmul %18, %11, %cst_13 {dimension_numbers = #tpu.dot_dimension_numbers<[1], [0], [0], [1], [0, 0, 1, 1], [], []>} : vector<8x128xbf16>, vector<128x384xbf16>, vector<8x384xf32> -> vector<8x384xf32>
    %20 = vector.extract_strided_slice %17 {offsets = [0, 0], sizes = [8, 128], strides = [1, 1]} : vector<8x384xf32> to vector<8x128xf32>
    %21 = vector.extract_strided_slice %17 {offsets = [0, 128], sizes = [8, 128], strides = [1, 1]} : vector<8x384xf32> to vector<8x128xf32>
    %22 = vector.extract_strided_slice %17 {offsets = [0, 256], sizes = [8, 128], strides = [1, 1]} : vector<8x384xf32> to vector<8x128xf32>
    %23 = vector.extract_strided_slice %19 {offsets = [0, 0], sizes = [8, 128], strides = [1, 1]} : vector<8x384xf32> to vector<8x128xf32>
    %24 = vector.extract_strided_slice %19 {offsets = [0, 128], sizes = [8, 128], strides = [1, 1]} : vector<8x384xf32> to vector<8x128xf32>
    %25 = vector.extract_strided_slice %19 {offsets = [0, 256], sizes = [8, 128], strides = [1, 1]} : vector<8x384xf32> to vector<8x128xf32>
    %26 = arith.addf %20, %23 : vector<8x128xf32>
    %27 = arith.negf %26 : vector<8x128xf32>
    %28 = math.exp %27 : vector<8x128xf32>
    %cst_14 = arith.constant 1.000000e+00 : f32
    %29 = vector.broadcast %cst_14 : f32 to vector<8x128xf32>
    %30 = arith.addf %29, %28 : vector<8x128xf32>
    %31 = arith.divf %29, %30 : vector<8x128xf32>
    %32 = arith.addf %21, %24 : vector<8x128xf32>
    %33 = arith.negf %32 : vector<8x128xf32>
    %34 = math.exp %33 : vector<8x128xf32>
    %cst_15 = arith.constant 1.000000e+00 : f32
    %35 = vector.broadcast %cst_15 : f32 to vector<8x128xf32>
    %36 = arith.addf %35, %34 : vector<8x128xf32>
    %37 = arith.divf %35, %36 : vector<8x128xf32>
    %38 = arith.addf %25, %14 : vector<8x128xf32>
    %39 = arith.mulf %31, %38 : vector<8x128xf32>
    %40 = arith.addf %22, %39 : vector<8x128xf32>
    %41 = math.tanh %40 : vector<8x128xf32>
    %cst_16 = arith.constant 1.000000e+00 : f32
    %42 = vector.broadcast %cst_16 : f32 to vector<8x128xf32>
    %43 = arith.subf %42, %37 : vector<8x128xf32>
    %44 = arith.mulf %43, %41 : vector<8x128xf32>
    %45 = arith.mulf %37, %15 : vector<8x128xf32>
    %46 = arith.addf %44, %45 : vector<8x128xf32>
    %c4_i32 = arith.constant 4 : i32
    %47 = arith.muli %arg0, %c4_i32 : i32
    %c0_i32_17 = arith.constant 0 : i32
    %48 = arith.addi %47, %c0_i32_17 : i32
    %c8_i32 = arith.constant 8 : i32
    %49 = arith.cmpi slt, %48, %c8_i32 : i32
    %50 = arith.select %49, %46, %15 : vector<8x128xf32>
    %51 = vector.extract_strided_slice %10 {offsets = [1, 0, 0], sizes = [1, 8, 384], strides = [1, 1, 1]} : vector<4x8x384xf32> to vector<1x8x384xf32>
    %52 = vector.shape_cast %51 : vector<1x8x384xf32> to vector<8x384xf32>
    %53 = arith.truncf %50 : vector<8x128xf32> to vector<8x128xbf16>
    %cst_18 = arith.constant dense<0.000000e+00> : vector<8x384xf32>
    %54 = tpu.matmul %53, %11, %cst_18 {dimension_numbers = #tpu.dot_dimension_numbers<[1], [0], [0], [1], [0, 0, 1, 1], [], []>} : vector<8x128xbf16>, vector<128x384xbf16>, vector<8x384xf32> -> vector<8x384xf32>
    %55 = vector.extract_strided_slice %52 {offsets = [0, 0], sizes = [8, 128], strides = [1, 1]} : vector<8x384xf32> to vector<8x128xf32>
    %56 = vector.extract_strided_slice %52 {offsets = [0, 128], sizes = [8, 128], strides = [1, 1]} : vector<8x384xf32> to vector<8x128xf32>
    %57 = vector.extract_strided_slice %52 {offsets = [0, 256], sizes = [8, 128], strides = [1, 1]} : vector<8x384xf32> to vector<8x128xf32>
    %58 = vector.extract_strided_slice %54 {offsets = [0, 0], sizes = [8, 128], strides = [1, 1]} : vector<8x384xf32> to vector<8x128xf32>
    %59 = vector.extract_strided_slice %54 {offsets = [0, 128], sizes = [8, 128], strides = [1, 1]} : vector<8x384xf32> to vector<8x128xf32>
    %60 = vector.extract_strided_slice %54 {offsets = [0, 256], sizes = [8, 128], strides = [1, 1]} : vector<8x384xf32> to vector<8x128xf32>
    %61 = arith.addf %55, %58 : vector<8x128xf32>
    %62 = arith.negf %61 : vector<8x128xf32>
    %63 = math.exp %62 : vector<8x128xf32>
    %cst_19 = arith.constant 1.000000e+00 : f32
    %64 = vector.broadcast %cst_19 : f32 to vector<8x128xf32>
    %65 = arith.addf %64, %63 : vector<8x128xf32>
    %66 = arith.divf %64, %65 : vector<8x128xf32>
    %67 = arith.addf %56, %59 : vector<8x128xf32>
    %68 = arith.negf %67 : vector<8x128xf32>
    %69 = math.exp %68 : vector<8x128xf32>
    %cst_20 = arith.constant 1.000000e+00 : f32
    %70 = vector.broadcast %cst_20 : f32 to vector<8x128xf32>
    %71 = arith.addf %70, %69 : vector<8x128xf32>
    %72 = arith.divf %70, %71 : vector<8x128xf32>
    %73 = arith.addf %60, %14 : vector<8x128xf32>
    %74 = arith.mulf %66, %73 : vector<8x128xf32>
    %75 = arith.addf %57, %74 : vector<8x128xf32>
    %76 = math.tanh %75 : vector<8x128xf32>
    %cst_21 = arith.constant 1.000000e+00 : f32
    %77 = vector.broadcast %cst_21 : f32 to vector<8x128xf32>
    %78 = arith.subf %77, %72 : vector<8x128xf32>
    %79 = arith.mulf %78, %76 : vector<8x128xf32>
    %80 = arith.mulf %72, %50 : vector<8x128xf32>
    %81 = arith.addf %79, %80 : vector<8x128xf32>
    %c4_i32_22 = arith.constant 4 : i32
    %82 = arith.muli %arg0, %c4_i32_22 : i32
    %c1_i32 = arith.constant 1 : i32
    %83 = arith.addi %82, %c1_i32 : i32
    %c8_i32_23 = arith.constant 8 : i32
    %84 = arith.cmpi slt, %83, %c8_i32_23 : i32
    %85 = arith.select %84, %81, %50 : vector<8x128xf32>
    %86 = vector.extract_strided_slice %10 {offsets = [2, 0, 0], sizes = [1, 8, 384], strides = [1, 1, 1]} : vector<4x8x384xf32> to vector<1x8x384xf32>
    %87 = vector.shape_cast %86 : vector<1x8x384xf32> to vector<8x384xf32>
    %88 = arith.truncf %85 : vector<8x128xf32> to vector<8x128xbf16>
    %cst_24 = arith.constant dense<0.000000e+00> : vector<8x384xf32>
    %89 = tpu.matmul %88, %11, %cst_24 {dimension_numbers = #tpu.dot_dimension_numbers<[1], [0], [0], [1], [0, 0, 1, 1], [], []>} : vector<8x128xbf16>, vector<128x384xbf16>, vector<8x384xf32> -> vector<8x384xf32>
    %90 = vector.extract_strided_slice %87 {offsets = [0, 0], sizes = [8, 128], strides = [1, 1]} : vector<8x384xf32> to vector<8x128xf32>
    %91 = vector.extract_strided_slice %87 {offsets = [0, 128], sizes = [8, 128], strides = [1, 1]} : vector<8x384xf32> to vector<8x128xf32>
    %92 = vector.extract_strided_slice %87 {offsets = [0, 256], sizes = [8, 128], strides = [1, 1]} : vector<8x384xf32> to vector<8x128xf32>
    %93 = vector.extract_strided_slice %89 {offsets = [0, 0], sizes = [8, 128], strides = [1, 1]} : vector<8x384xf32> to vector<8x128xf32>
    %94 = vector.extract_strided_slice %89 {offsets = [0, 128], sizes = [8, 128], strides = [1, 1]} : vector<8x384xf32> to vector<8x128xf32>
    %95 = vector.extract_strided_slice %89 {offsets = [0, 256], sizes = [8, 128], strides = [1, 1]} : vector<8x384xf32> to vector<8x128xf32>
    %96 = arith.addf %90, %93 : vector<8x128xf32>
    %97 = arith.negf %96 : vector<8x128xf32>
    %98 = math.exp %97 : vector<8x128xf32>
    %cst_25 = arith.constant 1.000000e+00 : f32
    %99 = vector.broadcast %cst_25 : f32 to vector<8x128xf32>
    %100 = arith.addf %99, %98 : vector<8x128xf32>
    %101 = arith.divf %99, %100 : vector<8x128xf32>
    %102 = arith.addf %91, %94 : vector<8x128xf32>
    %103 = arith.negf %102 : vector<8x128xf32>
    %104 = math.exp %103 : vector<8x128xf32>
    %cst_26 = arith.constant 1.000000e+00 : f32
    %105 = vector.broadcast %cst_26 : f32 to vector<8x128xf32>
    %106 = arith.addf %105, %104 : vector<8x128xf32>
    %107 = arith.divf %105, %106 : vector<8x128xf32>
    %108 = arith.addf %95, %14 : vector<8x128xf32>
    %109 = arith.mulf %101, %108 : vector<8x128xf32>
    %110 = arith.addf %92, %109 : vector<8x128xf32>
    %111 = math.tanh %110 : vector<8x128xf32>
    %cst_27 = arith.constant 1.000000e+00 : f32
    %112 = vector.broadcast %cst_27 : f32 to vector<8x128xf32>
    %113 = arith.subf %112, %107 : vector<8x128xf32>
    %114 = arith.mulf %113, %111 : vector<8x128xf32>
    %115 = arith.mulf %107, %85 : vector<8x128xf32>
    %116 = arith.addf %114, %115 : vector<8x128xf32>
    %c4_i32_28 = arith.constant 4 : i32
    %117 = arith.muli %arg0, %c4_i32_28 : i32
    %c2_i32 = arith.constant 2 : i32
    %118 = arith.addi %117, %c2_i32 : i32
    %c8_i32_29 = arith.constant 8 : i32
    %119 = arith.cmpi slt, %118, %c8_i32_29 : i32
    %120 = arith.select %119, %116, %85 : vector<8x128xf32>
    %121 = vector.extract_strided_slice %10 {offsets = [3, 0, 0], sizes = [1, 8, 384], strides = [1, 1, 1]} : vector<4x8x384xf32> to vector<1x8x384xf32>
    %122 = vector.shape_cast %121 : vector<1x8x384xf32> to vector<8x384xf32>
    %123 = arith.truncf %120 : vector<8x128xf32> to vector<8x128xbf16>
    %cst_30 = arith.constant dense<0.000000e+00> : vector<8x384xf32>
    %124 = tpu.matmul %123, %11, %cst_30 {dimension_numbers = #tpu.dot_dimension_numbers<[1], [0], [0], [1], [0, 0, 1, 1], [], []>} : vector<8x128xbf16>, vector<128x384xbf16>, vector<8x384xf32> -> vector<8x384xf32>
    %125 = vector.extract_strided_slice %122 {offsets = [0, 0], sizes = [8, 128], strides = [1, 1]} : vector<8x384xf32> to vector<8x128xf32>
    %126 = vector.extract_strided_slice %122 {offsets = [0, 128], sizes = [8, 128], strides = [1, 1]} : vector<8x384xf32> to vector<8x128xf32>
    %127 = vector.extract_strided_slice %122 {offsets = [0, 256], sizes = [8, 128], strides = [1, 1]} : vector<8x384xf32> to vector<8x128xf32>
    %128 = vector.extract_strided_slice %124 {offsets = [0, 0], sizes = [8, 128], strides = [1, 1]} : vector<8x384xf32> to vector<8x128xf32>
    %129 = vector.extract_strided_slice %124 {offsets = [0, 128], sizes = [8, 128], strides = [1, 1]} : vector<8x384xf32> to vector<8x128xf32>
    %130 = vector.extract_strided_slice %124 {offsets = [0, 256], sizes = [8, 128], strides = [1, 1]} : vector<8x384xf32> to vector<8x128xf32>
    %131 = arith.addf %125, %128 : vector<8x128xf32>
    %132 = arith.negf %131 : vector<8x128xf32>
    %133 = math.exp %132 : vector<8x128xf32>
    %cst_31 = arith.constant 1.000000e+00 : f32
    %134 = vector.broadcast %cst_31 : f32 to vector<8x128xf32>
    %135 = arith.addf %134, %133 : vector<8x128xf32>
    %136 = arith.divf %134, %135 : vector<8x128xf32>
    %137 = arith.addf %126, %129 : vector<8x128xf32>
    %138 = arith.negf %137 : vector<8x128xf32>
    %139 = math.exp %138 : vector<8x128xf32>
    %cst_32 = arith.constant 1.000000e+00 : f32
    %140 = vector.broadcast %cst_32 : f32 to vector<8x128xf32>
    %141 = arith.addf %140, %139 : vector<8x128xf32>
    %142 = arith.divf %140, %141 : vector<8x128xf32>
    %143 = arith.addf %130, %14 : vector<8x128xf32>
    %144 = arith.mulf %136, %143 : vector<8x128xf32>
    %145 = arith.addf %127, %144 : vector<8x128xf32>
    %146 = math.tanh %145 : vector<8x128xf32>
    %cst_33 = arith.constant 1.000000e+00 : f32
    %147 = vector.broadcast %cst_33 : f32 to vector<8x128xf32>
    %148 = arith.subf %147, %142 : vector<8x128xf32>
    %149 = arith.mulf %148, %146 : vector<8x128xf32>
    %150 = arith.mulf %142, %120 : vector<8x128xf32>
    %151 = arith.addf %149, %150 : vector<8x128xf32>
    %c4_i32_34 = arith.constant 4 : i32
    %152 = arith.muli %arg0, %c4_i32_34 : i32
    %c3_i32 = arith.constant 3 : i32
    %153 = arith.addi %152, %c3_i32 : i32
    %c8_i32_35 = arith.constant 8 : i32
    %154 = arith.cmpi slt, %153, %c8_i32_35 : i32
    %155 = arith.select %154, %151, %120 : vector<8x128xf32>
    %c0_36 = arith.constant 0 : index
    %c0_37 = arith.constant 0 : index
    %156 = vector.load %arg6[%c0_36, %c0_37] : memref<8x128xf32, #tpu.memory_space<vmem>>, vector<8x128xf32>
    tpu.vector_store %arg6[%c0_36, %c0_37], %155 {strides = array<i32>} : memref<8x128xf32, #tpu.memory_space<vmem>>, vector<8x128xf32>,
    return
  }
  func.func @transform_0(%arg0: i32) -> (i32, i32, i32) {
    %c0_i32 = arith.constant 0 : i32
    %c0_i32_0 = arith.constant 0 : i32
    %c0_i32_1 = arith.constant 0 : i32
    return %arg0, %c0_i32, %c0_i32_0 : i32, i32, i32
  }
  func.func @transform_1(%arg0: i32) -> (i32, i32) {
    %c0_i32 = arith.constant 0 : i32
    %c0_i32_0 = arith.constant 0 : i32
    %c0_i32_1 = arith.constant 0 : i32
    return %c0_i32, %c0_i32_0 : i32, i32
  }
  func.func @transform_2(%arg0: i32) -> (i32, i32) {
    %c0_i32 = arith.constant 0 : i32
    %c0_i32_0 = arith.constant 0 : i32
    %c0_i32_1 = arith.constant 0 : i32
    return %c0_i32, %c0_i32_0 : i32, i32
  }
  func.func @transform_3(%arg0: i32) -> (i32, i32) {
    %c0_i32 = arith.constant 0 : i32
    %c0_i32_0 = arith.constant 0 : i32
    %c0_i32_1 = arith.constant 0 : i32
    return %c0_i32, %c0_i32_0 : i32, i32
  }
  func.func @transform_4(%arg0: i32) -> (i32, i32) {
    %c0_i32 = arith.constant 0 : i32
    %c0_i32_0 = arith.constant 0 : i32
    %c0_i32_1 = arith.constant 0 : i32
    return %c0_i32, %c0_i32_0 : i32, i32
  }
  func.func @transform_5(%arg0: i32) -> (i32, i32) {
    %c0_i32 = arith.constant 0 : i32
    %c0_i32_0 = arith.constant 0 : i32
    %c0_i32_1 = arith.constant 0 : i32
    return %c0_i32, %c0_i32_0 : i32, i32
  }
}

</mosaic_0001>

<llo_original>
// kernel: tpu_custom_call.1
$region0: #{tpu_custom_call.1}
  #allocation0 [shape = 'u32[]', space=smem, size = 0x4, offset = 0x4, fixed_abs, tag = 'smem constant byte address 0x4 - core index']
  #allocation1 [shape = 'u32[144,128]{1,0:T(1,128)}', space=vmem, size = 0x12000, scoped, tag = 'internal scratch']
  %s0 = inlined_call_operand.hbm [shape: bf16[8,8,16], index: 0, kind: input, shape index: {}]
  %s1 = inlined_call_operand.hbm [shape: bf16[16,384], index: 1, kind: input, shape index: {}]
  %s2 = inlined_call_operand.hbm [shape: bf16[128,384], index: 2, kind: input, shape index: {}]
  %s3 = inlined_call_operand.vmem [shape: f32[1,384], index: 3, kind: input, shape index: {}]
  %s4 = inlined_call_operand.vmem [shape: f32[1,128], index: 4, kind: input, shape index: {}]
  %s5 = inlined_call_operand.hbm [shape: f32[8,128], index: 5, kind: output, shape index: {}]
  %s6 = sld [smem:[#allocation0]]
  $region69: #{tpu_custom_call.1} parent=0
    _
  %s8 = ssub.s32 1, %s6
  %s9 = scalar_select 0, %s8, %s6
  $region1: #{tpu_custom_call.1} parent=0
    #allocation2 [shape = 'u8[16384]{0}', space=vmem, size = 0x4000, scoped, tag = 'input window, operand 0']
    #allocation3 [shape = 's32[2]{0}', space=sflag, size = 0x8, scoped, tag = 'scoped memory for tpu_custom_call.1']
    #allocation4 [shape = 's32[2]{0}', space=sflag, size = 0x8, scoped, tag = 'scoped memory for tpu_custom_call.1']
    #allocation5 [shape = 'u8[12288]{0}', space=vmem, size = 0x3000, scoped, tag = 'input window, operand 1, single buffered']
    #allocation6 [shape = 's32[1]{0}', space=sflag, size = 0x4, scoped, tag = 'scoped memory for tpu_custom_call.1']
    #allocation7 [shape = 'u8[98304]{0}', space=vmem, size = 0x18000, scoped, tag = 'input window, operand 2, single buffered']
    #allocation8 [shape = 'u8[4096]{0}', space=vmem, size = 0x1000, scoped, tag = 'output window, operand 0, single buffered']
    %10 = vsyncpa [#allocation3], 0
    %s11 = scalar_lea.sflag [#allocation3], 1
    %12 = vsyncpa %s11, 0
    %13 = vsyncpa [#allocation6], 0
    %14 = vsyncpa [#allocation4], 0
    loop: start=0, step=1, limit=4
    $region2: #{tpu_custom_call.1} parent=1 // loop_pre_header
      _
    $region3: #{tpu_custom_call.1} parent=1 // loop_header
      %s16 = sphi 0, %s20
      %p17 = scmp.ge.s32.totalorder %s16, 4
      %s26 = sphi 0, %s28
      %s29 = sphi 0, %s26
      %s30 = sphi 0, %s29
      %s46 = sphi 0, %s30
      %s50 = sphi 0, %s50
      %s52 = sphi 0, %s50
      %s53 = sphi 0, %s52
      %s67 = sphi 0, %s53
      %s71 = sphi 0, %s71
      %s73 = sphi 0, %s71
      %s74 = sphi 0, %s73
      %s88 = sphi 0, %s74
      %s92 = sphi 0, %s92
      %s94 = sphi 0, %s92
      %s95 = sphi 0, %s94
      %s109 = sphi 0, %s95
      %s113 = sphi 0, %s113
      %s115 = sphi 0, %s113
      %s116 = sphi 0, %s115
      %s130 = sphi 0, %s116
      %s134 = sphi 0, %s134
      %s136 = sphi 0, %s134
      %s137 = sphi 0, %s136
      %s151 = sphi 0, %s137
    $region4: #{tpu_custom_call.1} parent=1 // loop_header_branch
      %19 = sbr.rel (%p17) target = $region8
    $region5: #{tpu_custom_call.1} parent=1 // loop_body
      %s21 = ssub.s32 %s16, 1
      %s22 = ssub.s32 %s16, 2
      %s23 = sadd.s32 %s16, 1
      %s24 = ssub.s32 %s16, %s23
      %p25 = scmp.eq.s32.totalorder %s24, 0
      %s27 = sadd.s32 %s26, 1
      %s28 = scalar_select %p25, %s26, %s27
      %p31 = pneg %p25
      %p32 = scmp.eq.s32.totalorder %s16, 1
      %p33 = por %p31, %p32
      %p34 = scmp.ne.s32.totalorder %s26, %s29
      %p35 = scmp.eq.s32.totalorder %s16, 0
      %p36 = por %p34, %p35
      %p37 = scmp.ne.s32.totalorder %s26, %s29
      %p38 = scmp.eq.s32.totalorder %s21, 1
      %p39 = por %p37, %p38
      %p40 = scmp.ne.s32.totalorder %s29, %s30
      %p41 = scmp.eq.s32.totalorder %s21, 0
      %p42 = por %p40, %p41
      %p43 = scmp.ne.s32.totalorder %s29, %s30
      %p44 = scmp.eq.s32.totalorder %s22, 1
      %p45 = por %p43, %p44
      %p47 = scmp.ne.s32.totalorder %s30, %s46
      %p48 = scmp.eq.s32.totalorder %s22, 0
      %p49 = por %p47, %p48
      %s51 = sadd.s32 %s50, 1
      %p54 = scmp.eq.s32.totalorder %s16, 1
      %p55 = scmp.ne.s32.totalorder %s50, %s52
      %p56 = scmp.eq.s32.totalorder %s16, 0
      %p57 = por %p55, %p56
      %p58 = scmp.ne.s32.totalorder %s50, %s52
      %p59 = scmp.eq.s32.totalorder %s21, 1
      %p60 = por %p58, %p59
      %p61 = scmp.ne.s32.totalorder %s52, %s53
      %p62 = scmp.eq.s32.totalorder %s21, 0
      %p63 = por %p61, %p62
      %p64 = scmp.ne.s32.totalorder %s52, %s53
      %p65 = scmp.eq.s32.totalorder %s22, 1
      %p66 = por %p64, %p65
      %p68 = scmp.ne.s32.totalorder %s53, %s67
      %p69 = scmp.eq.s32.totalorder %s22, 0
      %p70 = por %p68, %p69
      %s72 = sadd.s32 %s71, 1
      %p75 = scmp.eq.s32.totalorder %s16, 1
      %p76 = scmp.ne.s32.totalorder %s71, %s73
      %p77 = scmp.eq.s32.totalorder %s16, 0
      %p78 = por %p76, %p77
      %p79 = scmp.ne.s32.totalorder %s71, %s73
      %p80 = scmp.eq.s32.totalorder %s21, 1
      %p81 = por %p79, %p80
      %p82 = scmp.ne.s32.totalorder %s73, %s74
      %p83 = scmp.eq.s32.totalorder %s21, 0
      %p84 = por %p82, %p83
      %p85 = scmp.ne.s32.totalorder %s73, %s74
      %p86 = scmp.eq.s32.totalorder %s22, 1
      %p87 = por %p85, %p86
      %p89 = scmp.ne.s32.totalorder %s74, %s88
      %p90 = scmp.eq.s32.totalorder %s22, 0
      %p91 = por %p89, %p90
      %s93 = sadd.s32 %s92, 1
      %p96 = scmp.eq.s32.totalorder %s16, 1
      %p97 = scmp.ne.s32.totalorder %s92, %s94
      %p98 = scmp.eq.s32.totalorder %s16, 0
      %p99 = por %p97, %p98
      %p100 = scmp.ne.s32.totalorder %s92, %s94
      %p101 = scmp.eq.s32.totalorder %s21, 1
      %p102 = por %p100, %p101
      %p103 = scmp.ne.s32.totalorder %s94, %s95
      %p104 = scmp.eq.s32.totalorder %s21, 0
      %p105 = por %p103, %p104
      %p106 = scmp.ne.s32.totalorder %s94, %s95
      %p107 = scmp.eq.s32.totalorder %s22, 1
      %p108 = por %p106, %p107
      %p110 = scmp.ne.s32.totalorder %s95, %s109
      %p111 = scmp.eq.s32.totalorder %s22, 0
      %p112 = por %p110, %p111
      %s114 = sadd.s32 %s113, 1
      %p117 = scmp.eq.s32.totalorder %s16, 1
      %p118 = scmp.ne.s32.totalorder %s113, %s115
      %p119 = scmp.eq.s32.totalorder %s16, 0
      %p120 = por %p118, %p119
      %p121 = scmp.ne.s32.totalorder %s113, %s115
      %p122 = scmp.eq.s32.totalorder %s21, 1
      %p123 = por %p121, %p122
      %p124 = scmp.ne.s32.totalorder %s115, %s116
      %p125 = scmp.eq.s32.totalorder %s21, 0
      %p126 = por %p124, %p125
      %p127 = scmp.ne.s32.totalorder %s115, %s116
      %p128 = scmp.eq.s32.totalorder %s22, 1
      %p129 = por %p127, %p128
      %p131 = scmp.ne.s32.totalorder %s116, %s130
      %p132 = scmp.eq.s32.totalorder %s22, 0
      %p133 = por %p131, %p132
      %s135 = sadd.s32 %s134, 1
      %p138 = scmp.eq.s32.totalorder %s16, 1
      %p139 = scmp.ne.s32.totalorder %s134, %s136
      %p140 = scmp.eq.s32.totalorder %s16, 0
      %p141 = por %p139, %p140
      %p142 = scmp.ne.s32.totalorder %s134, %s136
      %p143 = scmp.eq.s32.totalorder %s21, 1
      %p144 = por %p142, %p143
      %p145 = scmp.ne.s32.totalorder %s136, %s137
      %p146 = scmp.eq.s32.totalorder %s21, 0
      %p147 = por %p145, %p146
      %p148 = scmp.ne.s32.totalorder %s136, %s137
      %p149 = scmp.eq.s32.totalorder %s22, 1
      %p150 = por %p148, %p149
      %p152 = scmp.ne.s32.totalorder %s137, %s151
      %p153 = scmp.eq.s32.totalorder %s22, 0
      %p154 = por %p152, %p153
      %p155 = scmp.le.s32.totalorder 1, %s16
      %p156 = scmp.lt.s32.totalorder %s16, 3
      %p157 = pnand %p155, %p156
      %p158 = pneg %p157
      // Predicated region
      $region9: #{tpu_custom_call.1} parent=5 // pred_check
        _
      $region10: #{tpu_custom_call.1} parent=5 // pred_check_branch
        %160 = sbr.rel (%p157) target = $region12
      $region11: #{tpu_custom_call.1} parent=5 // pred_region
        %s161 = ssub.s32 %s16, 1
        // Predicated region
        $region13: #{tpu_custom_call.1} parent=11 // pred_check
          %p162 = pneg %p63
        $region14: #{tpu_custom_call.1} parent=11 // pred_check_branch
          %164 = sbr.rel (%p162) target = $region16
        $region15: #{tpu_custom_call.1} parent=11 // pred_region
          %s166 = ssub.s32 384, 384
          %167 = vsyncadd [#allocation6], %s166
          %s168 = sshll.u32 [#allocation5], 4
          %s169 = int_to_ptr.vmem [resolvable:$true] %s168
          %174 = dma.hbm_to_vmem [thread:$0]  %s1, 384, %s169, [#allocation6], 192, 192, 12
        $region16: #{tpu_custom_call.1} parent=11 // pred_fallthru
          _
        // Predicated region
        $region17: #{tpu_custom_call.1} parent=11 // pred_check
          %p175 = pneg %p84
        $region18: #{tpu_custom_call.1} parent=11 // pred_check_branch
          %177 = sbr.rel (%p175) target = $region20
        $region19: #{tpu_custom_call.1} parent=11 // pred_region
          %s179 = ssub.s32 3072, 3072
          %180 = vsyncadd [#allocation6], %s179
          %s181 = sshll.u32 [#allocation7], 4
          %s182 = int_to_ptr.vmem [resolvable:$true] %s181
          %187 = dma.hbm_to_vmem [thread:$0]  %s2, 3072, %s182, [#allocation6], 192, 192, 12
        $region20: #{tpu_custom_call.1} parent=11 // pred_fallthru
          _
        // Predicated region
        $region21: #{tpu_custom_call.1} parent=11 // pred_check
          %p188 = pneg %p105
        $region22: #{tpu_custom_call.1} parent=11 // pred_check_branch
          %190 = sbr.rel (%p188) target = $region24
        $region23: #{tpu_custom_call.1} parent=11 // pred_region
          _
        $region24: #{tpu_custom_call.1} parent=11 // pred_fallthru
          _
        // Predicated region
        $region25: #{tpu_custom_call.1} parent=11 // pred_check
          %p191 = pneg %p126
        $region26: #{tpu_custom_call.1} parent=11 // pred_check_branch
          %193 = sbr.rel (%p191) target = $region28
        $region27: #{tpu_custom_call.1} parent=11 // pred_region
          _
        $region28: #{tpu_custom_call.1} parent=11 // pred_fallthru
          _
      $region12: #{tpu_custom_call.1} parent=5 // pred_fallthru
        _
      %p194 = scmp.lt.s32.totalorder %s16, 2
      // Predicated region
      $region29: #{tpu_custom_call.1} parent=5 // pred_check
        %p195 = pneg %p194
      $region30: #{tpu_custom_call.1} parent=5 // pred_check_branch
        %197 = sbr.rel (%p195) target = $region32
      $region31: #{tpu_custom_call.1} parent=5 // pred_region
        // Predicated region
        $region33: #{tpu_custom_call.1} parent=31 // pred_check
          %p198 = pneg %p36
        $region34: #{tpu_custom_call.1} parent=31 // pred_check_branch
          %200 = sbr.rel (%p198) target = $region36
        $region35: #{tpu_custom_call.1} parent=31 // pred_region
          %s201 = sand.u32 %s26, 1
          %s202 = scalar_lea.sflag [#allocation3], %s201
          %s203 = sand.u32 %s26, 1
          %s204 = smul.addr %s203, 16
          %s205 = scalar_lea.vmem [#allocation2], %s204
          %s206 = smul.u32 4, %s16
          %s208 = ssub.s32 256, 256
          %209 = vsyncadd %s202, %s208
          %s210 = smul.addr %s206, 64
          %s211 = scalar_lea.hbm %s0, %s210
          %s212 = sshll.u32 %s205, 4
          %s213 = int_to_ptr.vmem [resolvable:$true] %s212
          %218 = dma.hbm_to_vmem [thread:$0]  %s211, 256, %s213, %s202, 64, 64, 4
        $region36: #{tpu_custom_call.1} parent=31 // pred_fallthru
          _
      $region32: #{tpu_custom_call.1} parent=5 // pred_fallthru
        _
      %p219 = scmp.le.s32.totalorder 1, %s16
      %p220 = scmp.lt.s32.totalorder %s16, 3
      %p221 = pnand %p219, %p220
      %p222 = pneg %p221
      // Predicated region
      $region37: #{tpu_custom_call.1} parent=5 // pred_check
        _
      $region38: #{tpu_custom_call.1} parent=5 // pred_check_branch
        %224 = sbr.rel (%p221) target = $region40
      $region39: #{tpu_custom_call.1} parent=5 // pred_region
        %s225 = ssub.s32 %s16, 1
        %s226 = sand.u32 %s29, 1
        %s227 = scalar_lea.sflag [#allocation3], %s226
        %s228 = sand.u32 %s29, 1
        %s229 = smul.addr %s228, 16
        %s230 = scalar_lea.vmem [#allocation2], %s229
        // Predicated region
        $region41: #{tpu_custom_call.1} parent=39 // pred_check
          %p231 = pneg %p42
        $region42: #{tpu_custom_call.1} parent=39 // pred_check_branch
          %233 = sbr.rel (%p231) target = $region44
        $region43: #{tpu_custom_call.1} parent=39 // pred_region
          %234 = dma.done %s227, 256
        $region44: #{tpu_custom_call.1} parent=39 // pred_fallthru
          _
        // Predicated region
        $region45: #{tpu_custom_call.1} parent=39 // pred_check
          %p235 = pneg %p63
        $region46: #{tpu_custom_call.1} parent=39 // pred_check_branch
          %237 = sbr.rel (%p235) target = $region48
        $region47: #{tpu_custom_call.1} parent=39 // pred_region
          %238 = dma.done [#allocation6], 384
        $region48: #{tpu_custom_call.1} parent=39 // pred_fallthru
          _
        // Predicated region
        $region49: #{tpu_custom_call.1} parent=39 // pred_check
          %p239 = pneg %p84
        $region50: #{tpu_custom_call.1} parent=39 // pred_check_branch
          %241 = sbr.rel (%p239) target = $region52
        $region51: #{tpu_custom_call.1} parent=39 // pred_region
          %242 = dma.done [#allocation6], 3072
        $region52: #{tpu_custom_call.1} parent=39 // pred_fallthru
          _
        %s243 = sand.u32 %s29, 1
        %s244 = scalar_lea.sflag [#allocation3], %s243
        %s245 = sand.u32 %s29, 1
        %s246 = smul.addr %s245, 16
        %s247 = scalar_lea.vmem [#allocation2], %s246
        %p248 = pneg %p42
        %p249 = pneg %p39
        %p250 = pneg %p63
        %p251 = pneg %p60
        %p252 = pneg %p84
        %p253 = pneg %p81
        %p254 = pneg %p105
        %p255 = pneg %p102
        %p256 = pneg %p126
        %p257 = pneg %p123
        %p258 = pneg %p147
        %p259 = pneg %p144
        %s260 = smul.u32 4, %s21
        %p262 = scmp.eq.s32.totalorder %s21, 0
        // Predicated region
        $region53: #{tpu_custom_call.1} parent=39 // pred_check
          %p263 = pneg %p262
        $region54: #{tpu_custom_call.1} parent=39 // pred_check_branch
          %265 = sbr.rel (%p263) target = $region56
        $region55: #{tpu_custom_call.1} parent=39 // pred_region
          %266 = vst [vmem:[#allocation8] sm:$0xff] 0.0
        $region56: #{tpu_custom_call.1} parent=39 // pred_fallthru
          _
        %v267 = vld [vmem:[%s230] sm:$0xf]
        %v268 = vld [vmem:[%s230 + $0x4] sm:$0xf]
        %v269 = vld [vmem:[%s230 + $0x8] sm:$0xf]
        %v270 = vld [vmem:[%s230 + $0xc] sm:$0xf]
        %v271 = vld [vmem:[#allocation5] sm:$0xff]
        %v272 = vld [vmem:[#allocation5 + $0x8] sm:$0xf]
        %v273 = vld [vmem:[#allocation5 + $0xc] sm:$0xff]
        %v274 = vld [vmem:[#allocation5 + $0x14] sm:$0xf]
        %v275 = vld [vmem:[%s3] sm:$0x7]
        %v277 = vlaneseq
        %v278 = vshrl.u32 %v277, 7
        %v279 = vsub.s32 0, %v278
        %v280 = vrot.slane %v275, %v279
        %v281 = vlaneseq
        %v282 = vshrl.u32 %v281, 7
        %v283 = vsub.s32 1, %v282
        %v284 = vrot.slane %v275, %v283
        %v285 = vlaneseq
        %v286 = vshrl.u32 %v285, 7
        %v287 = vsub.s32 2, %v286
        %v288 = vrot.slane %v275, %v287
        %v296 = vunpack.c.l.b16 %v267
        %v297 = vunpack.c.l.b16 %v268
        %v298 = vunpack.c.l.b16 %v269
        %v299 = vunpack.c.l.b16 %v270
        %v300 = vpack.c.b16 %v297, %v296
        %v301 = vpack.c.b16 %v299, %v298
        %v306 = vunpack.c.l.b16 %v271
        %v307 = vunpack.c.h.b16 %v271
        %v308 = vunpack.c.l.b16 %v272
        %v309 = vunpack.c.l.b16 %v273
        %v310 = vunpack.c.h.b16 %v273
        %v311 = vunpack.c.l.b16 %v274
        %v312 = vpack.c.b16 %v309, %v306
        %v313 = vpack.c.b16 %v310, %v307
        %v314 = vpack.c.b16 %v311, %v308
        %vm318 = vcmask 130048
        %v320 = vsel %vm318, %v300, 0
        %v323 = vsel %vm318, %v301, 0
        %325 = vmatprep.subr.bf16.mxu0 %v313
        %326 = vmatpush1.bf16.msra.mxu0 %v312
        %327 = vmatprep.subr.bf16.mxu0 0
        %328 = vmatpush1.bf16.msra.mxu0 0
        %329 = vmatprep.subr.bf16.mxu0 0
        %330 = vmatpush1.bf16.msra.mxu0 0
        %331 = vmatprep.subr.bf16.mxu0 0
        %332 = vmatpush1.bf16.msra.mxu0 0
        %333 = vmatprep.subr.bf16.mxu0 0
        %334 = vmatpush1.bf16.msra.mxu0 0
        %335 = vmatprep.subr.bf16.mxu0 0
        %336 = vmatpush1.bf16.msra.mxu0 0
        %337 = vmatprep.subr.bf16.mxu0 0
        %338 = vmatpush1.bf16.msra.mxu0 0
        %339 = vmatprep.subr.bf16.mxu0 0
        %340 = vmatpush1.bf16.msra.mxu0 0
        %341 = vmatprep.subr.bf16.mxu0 0
        %342 = vmatpush1.bf16.msra.mxu0 0
        %343 = vmatprep.subr.bf16.mxu0 0
        %344 = vmatpush1.bf16.msra.mxu0 0
        %345 = vmatprep.subr.bf16.mxu0 0
        %346 = vmatpush1.bf16.msra.mxu0 0
        %347 = vmatprep.subr.bf16.mxu0 0
        %348 = vmatpush1.bf16.msra.mxu0 0
        %349 = vmatprep.subr.bf16.mxu0 0
        %350 = vmatpush1.bf16.msra.mxu0 0
        %351 = vmatprep.subr.bf16.mxu0 0
        %352 = vmatpush1.bf16.msra.mxu0 0
        %353 = vmatprep.subr.bf16.mxu0 0
        %354 = vmatpush1.bf16.msra.mxu0 0
        %355 = vmatprep.subr.bf16.mxu0 0
        %356 = vmatpush1.bf16.msra.mxu0 0
        %357 = vmatprep.mubr.bf16.mxu0 0
        %358 = vmatmul.mubr.bf16.gmra.mrb[0].mxu0 %v320
        %v359 = vpop.f32.mrb[0].mxu0
        %v360 = vadd.f32 %v280, %v359
        %v361 = vpop.f32.mrb[0].mxu0
        %v362 = vadd.f32 %v284, %v361
        %v363 = vpop.f32.mrb[0].mxu0
        %v364 = vadd.f32 %v280, %v363
        %v365 = vpop.f32.mrb[0].mxu0
        %v366 = vadd.f32 %v284, %v365
        %367 = vmatprep.mubr.bf16.mxu0 0
        %368 = vmatmul.mubr.bf16.gmra.mrb[0].mxu0 %v323
        %v369 = vpop.f32.mrb[0].mxu0
        %v370 = vadd.f32 %v280, %v369
        %v371 = vpop.f32.mrb[0].mxu0
        %v372 = vadd.f32 %v284, %v371
        %v373 = vpop.f32.mrb[0].mxu0
        %v374 = vadd.f32 %v280, %v373
        %v375 = vpop.f32.mrb[0].mxu0
        %v376 = vadd.f32 %v284, %v375
        %377 = vdwg.mxu0
        %378 = vmatprep.subr.bf16.mxu0 0
        %379 = vmatpush1.bf16.msra.mxu0 %v314
        %380 = vmatprep.subr.bf16.mxu0 0
        %381 = vmatpush1.bf16.msra.mxu0 0
        %382 = vmatprep.subr.bf16.mxu0 0
        %383 = vmatpush1.bf16.msra.mxu0 0
        %384 = vmatprep.subr.bf16.mxu0 0
        %385 = vmatpush1.bf16.msra.mxu0 0
        %386 = vmatprep.subr.bf16.mxu0 0
        %387 = vmatpush1.bf16.msra.mxu0 0
        %388 = vmatprep.subr.bf16.mxu0 0
        %389 = vmatpush1.bf16.msra.mxu0 0
        %390 = vmatprep.subr.bf16.mxu0 0
        %391 = vmatpush1.bf16.msra.mxu0 0
        %392 = vmatprep.subr.bf16.mxu0 0
        %393 = vmatpush1.bf16.msra.mxu0 0
        %394 = vmatprep.subr.bf16.mxu0 0
        %395 = vmatpush1.bf16.msra.mxu0 0
        %396 = vmatprep.subr.bf16.mxu0 0
        %397 = vmatpush1.bf16.msra.mxu0 0
        %398 = vmatprep.subr.bf16.mxu0 0
        %399 = vmatpush1.bf16.msra.mxu0 0
        %400 = vmatprep.subr.bf16.mxu0 0
        %401 = vmatpush1.bf16.msra.mxu0 0
        %402 = vmatprep.subr.bf16.mxu0 0
        %403 = vmatpush1.bf16.msra.mxu0 0
        %404 = vmatprep.subr.bf16.mxu0 0
        %405 = vmatpush1.bf16.msra.mxu0 0
        %406 = vmatprep.subr.bf16.mxu0 0
        %407 = vmatpush1.bf16.msra.mxu0 0
        %408 = vmatprep.subr.bf16.mxu0 0
        %409 = vmatpush1.bf16.msra.mxu0 0
        %410 = vmatprep.mubr.bf16.mxu0 0
        %411 = vmatmul.mubr.bf16.gmra.mrb[0].mxu0 %v320
        %v412 = vpop.f32.mrb[0].mxu0
        %v413 = vadd.f32 %v288, %v412
        %v414 = vpop.f32.mrb[0].mxu0
        %v415 = vpop.f32.mrb[0].mxu0
        %v416 = vadd.f32 %v288, %v415
        %v417 = vpop.f32.mrb[0].mxu0
        %418 = vmatprep.mubr.bf16.mxu0 0
        %419 = vmatmul.mubr.bf16.gmra.mrb[0].mxu0 %v323
        %v420 = vpop.f32.mrb[0].mxu0
        %v421 = vadd.f32 %v288, %v420
        %v422 = vpop.f32.mrb[0].mxu0
        %v423 = vpop.f32.mrb[0].mxu0
        %v424 = vadd.f32 %v288, %v423
        %v425 = vpop.f32.mrb[0].mxu0
        %426 = vdwg.mxu0
        %v427 = vld [vmem:[#allocation7] sm:$0xff]
        %v428 = vld [vmem:[#allocation7 + $0x8] sm:$0xf]
        %v429 = vld [vmem:[#allocation7 + $0xc] sm:$0xff]
        %v430 = vld [vmem:[#allocation7 + $0x14] sm:$0xf]
        %v431 = vld [vmem:[#allocation7 + $0x18] sm:$0xff]
        %v432 = vld [vmem:[#allocation7 + $0x20] sm:$0xf]
        %v433 = vld [vmem:[#allocation7 + $0x24] sm:$0xff]
        %v434 = vld [vmem:[#allocation7 + $0x2c] sm:$0xf]
        %v435 = vld [vmem:[#allocation7 + $0x30] sm:$0xff]
        %v436 = vld [vmem:[#allocation7 + $0x38] sm:$0xf]
        %v437 = vld [vmem:[#allocation7 + $0x3c] sm:$0xff]
        %v438 = vld [vmem:[#allocation7 + $0x44] sm:$0xf]
        %v439 = vld [vmem:[#allocation7 + $0x48] sm:$0xff]
        %v440 = vld [vmem:[#allocation7 + $0x50] sm:$0xf]
        %v441 = vld [vmem:[#allocation7 + $0x54] sm:$0xff]
        %v442 = vld [vmem:[#allocation7 + $0x5c] sm:$0xf]
        %v443 = vld [vmem:[#allocation7 + $0x60] sm:$0xff]
        %v444 = vld [vmem:[#allocation7 + $0x68] sm:$0xf]
        %v445 = vld [vmem:[#allocation7 + $0x6c] sm:$0xff]
        %v446 = vld [vmem:[#allocation7 + $0x74] sm:$0xf]
        %v447 = vld [vmem:[#allocation7 + $0x78] sm:$0xff]
        %v448 = vld [vmem:[#allocation7 + $0x80] sm:$0xf]
        %v449 = vld [vmem:[#allocation7 + $0x84] sm:$0xff]
        %v450 = vld [vmem:[#allocation7 + $0x8c] sm:$0xf]
        %v451 = vld [vmem:[#allocation7 + $0x90] sm:$0xff]
        %v452 = vld [vmem:[#allocation7 + $0x98] sm:$0xf]
        %v453 = vld [vmem:[#allocation7 + $0x9c] sm:$0xff]
        %v454 = vld [vmem:[#allocation7 + $0xa4] sm:$0xf]
        %v455 = vld [vmem:[#allocation7 + $0xa8] sm:$0xff]
        %v456 = vld [vmem:[#allocation7 + $0xb0] sm:$0xf]
        %v457 = vld [vmem:[#allocation7 + $0xb4] sm:$0xff]
        %v458 = vld [vmem:[#allocation7 + $0xbc] sm:$0xf]
        %v459 = vld [vmem:[%s4] sm:$0x1]
        %v461 = vlaneseq
        %v462 = vshrl.u32 %v461, 7
        %v463 = vsub.s32 0, %v462
        %v464 = vrot.slane %v459, %v463
        %v466 = vld [vmem:[#allocation8] sm:$0xff]
        %v467 = vpack.c.bf16 %v466, %v466
        %v500 = vunpack.c.l.b16 %v427
        %v501 = vunpack.c.h.b16 %v427
        %v502 = vunpack.c.l.b16 %v428
        %v503 = vunpack.c.l.b16 %v429
        %v504 = vunpack.c.h.b16 %v429
        %v505 = vunpack.c.l.b16 %v430
        %v506 = vunpack.c.l.b16 %v431
        %v507 = vunpack.c.h.b16 %v431
        %v508 = vunpack.c.l.b16 %v432
        %v509 = vunpack.c.l.b16 %v433
        %v510 = vunpack.c.h.b16 %v433
        %v511 = vunpack.c.l.b16 %v434
        %v512 = vunpack.c.l.b16 %v435
        %v513 = vunpack.c.h.b16 %v435
        %v514 = vunpack.c.l.b16 %v436
        %v515 = vunpack.c.l.b16 %v437
        %v516 = vunpack.c.h.b16 %v437
        %v517 = vunpack.c.l.b16 %v438
        %v518 = vunpack.c.l.b16 %v439
        %v519 = vunpack.c.h.b16 %v439
        %v520 = vunpack.c.l.b16 %v440
        %v521 = vunpack.c.l.b16 %v441
        %v522 = vunpack.c.h.b16 %v441
        %v523 = vunpack.c.l.b16 %v442
        %v524 = vunpack.c.l.b16 %v443
        %v525 = vunpack.c.h.b16 %v443
        %v526 = vunpack.c.l.b16 %v444
        %v527 = vunpack.c.l.b16 %v445
        %v528 = vunpack.c.h.b16 %v445
        %v529 = vunpack.c.l.b16 %v446
        %v530 = vunpack.c.l.b16 %v447
        %v531 = vunpack.c.h.b16 %v447
        %v532 = vunpack.c.l.b16 %v448
        %v533 = vunpack.c.l.b16 %v449
        %v534 = vunpack.c.h.b16 %v449
        %v535 = vunpack.c.l.b16 %v450
        %v536 = vunpack.c.l.b16 %v451
        %v537 = vunpack.c.h.b16 %v451
        %v538 = vunpack.c.l.b16 %v452
        %v539 = vunpack.c.l.b16 %v453
        %v540 = vunpack.c.h.b16 %v453
        %v541 = vunpack.c.l.b16 %v454
        %v542 = vunpack.c.l.b16 %v455
        %v543 = vunpack.c.h.b16 %v455
        %v544 = vunpack.c.l.b16 %v456
        %v545 = vunpack.c.l.b16 %v457
        %v546 = vunpack.c.h.b16 %v457
        %v547 = vunpack.c.l.b16 %v458
        %v548 = vpack.c.b16 %v503, %v500
        %v549 = vpack.c.b16 %v504, %v501
        %v550 = vpack.c.b16 %v505, %v502
        %v551 = vpack.c.b16 %v509, %v506
        %v552 = vpack.c.b16 %v510, %v507
        %v553 = vpack.c.b16 %v511, %v508
        %v554 = vpack.c.b16 %v515, %v512
        %v555 = vpack.c.b16 %v516, %v513
        %v556 = vpack.c.b16 %v517, %v514
        %v557 = vpack.c.b16 %v521, %v518
        %v558 = vpack.c.b16 %v522, %v519
        %v559 = vpack.c.b16 %v523, %v520
        %v560 = vpack.c.b16 %v527, %v524
        %v561 = vpack.c.b16 %v528, %v525
        %v562 = vpack.c.b16 %v529, %v526
        %v563 = vpack.c.b16 %v533, %v530
        %v564 = vpack.c.b16 %v534, %v531
        %v565 = vpack.c.b16 %v535, %v532
        %v566 = vpack.c.b16 %v539, %v536
        %v567 = vpack.c.b16 %v540, %v537
        %v568 = vpack.c.b16 %v541, %v538
        %v569 = vpack.c.b16 %v545, %v542
        %v570 = vpack.c.b16 %v546, %v543
        %v571 = vpack.c.b16 %v547, %v544
        %596 = vmatprep.subr.bf16.mxu0 %v549
        %597 = vmatpush1.bf16.msra.mxu0 %v548
        %598 = vmatprep.subr.bf16.mxu0 %v552
        %599 = vmatpush1.bf16.msra.mxu0 %v551
        %600 = vmatprep.subr.bf16.mxu0 %v555
        %601 = vmatpush1.bf16.msra.mxu0 %v554
        %602 = vmatprep.subr.bf16.mxu0 %v558
        %603 = vmatpush1.bf16.msra.mxu0 %v557
        %604 = vmatprep.subr.bf16.mxu0 %v561
        %605 = vmatpush1.bf16.msra.mxu0 %v560
        %606 = vmatprep.subr.bf16.mxu0 %v564
        %607 = vmatpush1.bf16.msra.mxu0 %v563
        %608 = vmatprep.subr.bf16.mxu0 %v567
        %609 = vmatpush1.bf16.msra.mxu0 %v566
        %610 = vmatprep.subr.bf16.mxu0 %v570
        %611 = vmatpush1.bf16.msra.mxu0 %v569
        %612 = vmatprep.subr.bf16.mxu0 0
        %613 = vmatpush1.bf16.msra.mxu0 0
        %614 = vmatprep.subr.bf16.mxu0 0
        %615 = vmatpush1.bf16.msra.mxu0 0
        %616 = vmatprep.subr.bf16.mxu0 0
        %617 = vmatpush1.bf16.msra.mxu0 0
        %618 = vmatprep.subr.bf16.mxu0 0
        %619 = vmatpush1.bf16.msra.mxu0 0
        %620 = vmatprep.subr.bf16.mxu0 0
        %621 = vmatpush1.bf16.msra.mxu0 0
        %622 = vmatprep.subr.bf16.mxu0 0
        %623 = vmatpush1.bf16.msra.mxu0 0
        %624 = vmatprep.subr.bf16.mxu0 0
        %625 = vmatpush1.bf16.msra.mxu0 0
        %626 = vmatprep.subr.bf16.mxu0 0
        %627 = vmatpush1.bf16.msra.mxu0 0
        %628 = vmatprep.mubr.bf16.mxu0 0
        %629 = vmatmul.mubr.bf16.gmra.mrb[0].mxu0 %v467
        %v630 = vpop.f32.mrb[0].mxu0
        %v631 = vadd.f32 0.0, %v630
        %v632 = vpop.f32.mrb[0].mxu0
        %v633 = vadd.f32 0.0, %v632
        %v634 = vpop.f32.mrb[0].mxu0
        %v635 = vpop.f32.mrb[0].mxu0
        %636 = vdwg.mxu0
        %637 = vmatprep.subr.bf16.mxu0 0
        %638 = vmatpush1.bf16.msra.mxu0 %v550
        %639 = vmatprep.subr.bf16.mxu0 0
        %640 = vmatpush1.bf16.msra.mxu0 %v553
        %641 = vmatprep.subr.bf16.mxu0 0
        %642 = vmatpush1.bf16.msra.mxu0 %v556
        %643 = vmatprep.subr.bf16.mxu0 0
        %644 = vmatpush1.bf16.msra.mxu0 %v559
        %645 = vmatprep.subr.bf16.mxu0 0
        %646 = vmatpush1.bf16.msra.mxu0 %v562
        %647 = vmatprep.subr.bf16.mxu0 0
        %648 = vmatpush1.bf16.msra.mxu0 %v565
        %649 = vmatprep.subr.bf16.mxu0 0
        %650 = vmatpush1.bf16.msra.mxu0 %v568
        %651 = vmatprep.subr.bf16.mxu0 0
        %652 = vmatpush1.bf16.msra.mxu0 %v571
        %653 = vmatprep.subr.bf16.mxu0 0
        %654 = vmatpush1.bf16.msra.mxu0 0
        %655 = vmatprep.subr.bf16.mxu0 0
        %656 = vmatpush1.bf16.msra.mxu0 0
        %657 = vmatprep.subr.bf16.mxu0 0
        %658 = vmatpush1.bf16.msra.mxu0 0
        %659 = vmatprep.subr.bf16.mxu0 0
        %660 = vmatpush1.bf16.msra.mxu0 0
        %661 = vmatprep.subr.bf16.mxu0 0
        %662 = vmatpush1.bf16.msra.mxu0 0
        %663 = vmatprep.subr.bf16.mxu0 0
        %664 = vmatpush1.bf16.msra.mxu0 0
        %665 = vmatprep.subr.bf16.mxu0 0
        %666 = vmatpush1.bf16.msra.mxu0 0
        %667 = vmatprep.subr.bf16.mxu0 0
        %668 = vmatpush1.bf16.msra.mxu0 0
        %669 = vmatprep.mubr.bf16.mxu0 0
        %670 = vmatmul.mubr.bf16.gmra.mrb[0].mxu0 %v467
        %v671 = vpop.f32.mrb[0].mxu0
        %v672 = vadd.f32 0.0, %v671
        %v673 = vpop.f32.mrb[0].mxu0
        %v674 = vpop.f32.mrb[0].mxu0
        %v675 = vpop.f32.mrb[0].mxu0
        %676 = vdwg.mxu0
        %v677 = vadd.f32 %v360, %v631
        %v678 = vxor.u32 %v677, 2147483648
        %v679 = vmul.f32 %v678, 1.442695
        %v680 = vpow.pop %v679
        %v681 = vadd.f32 %v680, 1.0
        %v682 = vrcp.pop %v681
        %v683 = vmul.f32 1.0, %v682
        %v684 = vadd.f32 %v362, %v633
        %v685 = vxor.u32 %v684, 2147483648
        %v686 = vmul.f32 %v685, 1.442695
        %v687 = vpow.pop %v686
        %v688 = vadd.f32 %v687, 1.0
        %v689 = vrcp.pop %v688
        %v690 = vmul.f32 1.0, %v689
        %v691 = vadd.f32 %v672, %v464
        %v692 = vmul.f32 %v683, %v691
        %v693 = vadd.f32 %v413, %v692
        %v694 = vtanh.pop %v693
        %v695 = vsub.f32 1.0, %v690
        %v696 = vmul.f32 %v695, %v694
        %v697 = vmul.f32 %v690, %v466
        %v698 = vadd.f32 %v696, %v697
        %s699 = smul.u32 %s21, 4
        %p700 = scmp.lt.s32.totalorder %s699, 8
        %s701 = scalar_select %p700, 1, 0
        %v702 = vstv %s701
        %vm703 = vcmp.eq.s32.totalorder %v702, 1
        %v704 = vsel %vm703, %v698, %v466
        %v705 = vpack.c.bf16 %v704, %v704
        %706 = vmatprep.subr.bf16.mxu0 %v549
        %707 = vmatpush1.bf16.msra.mxu0 %v548
        %708 = vmatprep.subr.bf16.mxu0 %v552
        %709 = vmatpush1.bf16.msra.mxu0 %v551
        %710 = vmatprep.subr.bf16.mxu0 %v555
        %711 = vmatpush1.bf16.msra.mxu0 %v554
        %712 = vmatprep.subr.bf16.mxu0 %v558
        %713 = vmatpush1.bf16.msra.mxu0 %v557
        %714 = vmatprep.subr.bf16.mxu0 %v561
        %715 = vmatpush1.bf16.msra.mxu0 %v560
        %716 = vmatprep.subr.bf16.mxu0 %v564
        %717 = vmatpush1.bf16.msra.mxu0 %v563
        %718 = vmatprep.subr.bf16.mxu0 %v567
        %719 = vmatpush1.bf16.msra.mxu0 %v566
        %720 = vmatprep.subr.bf16.mxu0 %v570
        %721 = vmatpush1.bf16.msra.mxu0 %v569
        %722 = vmatprep.subr.bf16.mxu0 0
        %723 = vmatpush1.bf16.msra.mxu0 0
        %724 = vmatprep.subr.bf16.mxu0 0
        %725 = vmatpush1.bf16.msra.mxu0 0
        %726 = vmatprep.subr.bf16.mxu0 0
        %727 = vmatpush1.bf16.msra.mxu0 0
        %728 = vmatprep.subr.bf16.mxu0 0
        %729 = vmatpush1.bf16.msra.mxu0 0
        %730 = vmatprep.subr.bf16.mxu0 0
        %731 = vmatpush1.bf16.msra.mxu0 0
        %732 = vmatprep.subr.bf16.mxu0 0
        %733 = vmatpush1.bf16.msra.mxu0 0
        %734 = vmatprep.subr.bf16.mxu0 0
        %735 = vmatpush1.bf16.msra.mxu0 0
        %736 = vmatprep.subr.bf16.mxu0 0
        %737 = vmatpush1.bf16.msra.mxu0 0
        %738 = vmatprep.mubr.bf16.mxu0 0
        %739 = vmatmul.mubr.bf16.gmra.mrb[0].mxu0 %v705
        %v740 = vpop.f32.mrb[0].mxu0
        %v741 = vadd.f32 0.0, %v740
        %v742 = vpop.f32.mrb[0].mxu0
        %v743 = vadd.f32 0.0, %v742
        %v744 = vpop.f32.mrb[0].mxu0
        %v745 = vpop.f32.mrb[0].mxu0
        %746 = vdwg.mxu0
        %747 = vmatprep.subr.bf16.mxu0 0
        %748 = vmatpush1.bf16.msra.mxu0 %v550
        %749 = vmatprep.subr.bf16.mxu0 0
        %750 = vmatpush1.bf16.msra.mxu0 %v553
        %751 = vmatprep.subr.bf16.mxu0 0
        %752 = vmatpush1.bf16.msra.mxu0 %v556
        %753 = vmatprep.subr.bf16.mxu0 0
        %754 = vmatpush1.bf16.msra.mxu0 %v559
        %755 = vmatprep.subr.bf16.mxu0 0
        %756 = vmatpush1.bf16.msra.mxu0 %v562
        %757 = vmatprep.subr.bf16.mxu0 0
        %758 = vmatpush1.bf16.msra.mxu0 %v565
        %759 = vmatprep.subr.bf16.mxu0 0
        %760 = vmatpush1.bf16.msra.mxu0 %v568
        %761 = vmatprep.subr.bf16.mxu0 0
        %762 = vmatpush1.bf16.msra.mxu0 %v571
        %763 = vmatprep.subr.bf16.mxu0 0
        %764 = vmatpush1.bf16.msra.mxu0 0
        %765 = vmatprep.subr.bf16.mxu0 0
        %766 = vmatpush1.bf16.msra.mxu0 0
        %767 = vmatprep.subr.bf16.mxu0 0
        %768 = vmatpush1.bf16.msra.mxu0 0
        %769 = vmatprep.subr.bf16.mxu0 0
        %770 = vmatpush1.bf16.msra.mxu0 0
        %771 = vmatprep.subr.bf16.mxu0 0
        %772 = vmatpush1.bf16.msra.mxu0 0
        %773 = vmatprep.subr.bf16.mxu0 0
        %774 = vmatpush1.bf16.msra.mxu0 0
        %775 = vmatprep.subr.bf16.mxu0 0
        %776 = vmatpush1.bf16.msra.mxu0 0
        %777 = vmatprep.subr.bf16.mxu0 0
        %778 = vmatpush1.bf16.msra.mxu0 0
        %779 = vmatprep.mubr.bf16.mxu0 0
        %780 = vmatmul.mubr.bf16.gmra.mrb[0].mxu0 %v705
        %v781 = vpop.f32.mrb[0].mxu0
        %v782 = vadd.f32 0.0, %v781
        %v783 = vpop.f32.mrb[0].mxu0
        %v784 = vpop.f32.mrb[0].mxu0
        %v785 = vpop.f32.mrb[0].mxu0
        %786 = vdwg.mxu0
        %v787 = vadd.f32 %v364, %v741
        %v788 = vxor.u32 %v787, 2147483648
        %v789 = vmul.f32 %v788, 1.442695
        %v790 = vpow.pop %v789
        %v791 = vadd.f32 %v790, 1.0
        %v792 = vrcp.pop %v791
        %v793 = vmul.f32 1.0, %v792
        %v794 = vadd.f32 %v366, %v743
        %v795 = vxor.u32 %v794, 2147483648
        %v796 = vmul.f32 %v795, 1.442695
        %v797 = vpow.pop %v796
        %v798 = vadd.f32 %v797, 1.0
        %v799 = vrcp.pop %v798
        %v800 = vmul.f32 1.0, %v799
        %v801 = vadd.f32 %v782, %v464
        %v802 = vmul.f32 %v793, %v801
        %v803 = vadd.f32 %v416, %v802
        %v804 = vtanh.pop %v803
        %v805 = vsub.f32 1.0, %v800
        %v806 = vmul.f32 %v805, %v804
        %v807 = vmul.f32 %v800, %v704
        %v808 = vadd.f32 %v806, %v807
        %s809 = sadd.s32 %s699, 1
        %p810 = scmp.lt.s32.totalorder %s809, 8
        %s811 = scalar_select %p810, 1, 0
        %v812 = vstv %s811
        %vm813 = vcmp.eq.s32.totalorder %v812, 1
        %v814 = vsel %vm813, %v808, %v704
        %v815 = vpack.c.bf16 %v814, %v814
        %816 = vmatprep.subr.bf16.mxu0 %v549
        %817 = vmatpush1.bf16.msra.mxu0 %v548
        %818 = vmatprep.subr.bf16.mxu0 %v552
        %819 = vmatpush1.bf16.msra.mxu0 %v551
        %820 = vmatprep.subr.bf16.mxu0 %v555
        %821 = vmatpush1.bf16.msra.mxu0 %v554
        %822 = vmatprep.subr.bf16.mxu0 %v558
        %823 = vmatpush1.bf16.msra.mxu0 %v557
        %824 = vmatprep.subr.bf16.mxu0 %v561
        %825 = vmatpush1.bf16.msra.mxu0 %v560
        %826 = vmatprep.subr.bf16.mxu0 %v564
        %827 = vmatpush1.bf16.msra.mxu0 %v563
        %828 = vmatprep.subr.bf16.mxu0 %v567
        %829 = vmatpush1.bf16.msra.mxu0 %v566
        %830 = vmatprep.subr.bf16.mxu0 %v570
        %831 = vmatpush1.bf16.msra.mxu0 %v569
        %832 = vmatprep.subr.bf16.mxu0 0
        %833 = vmatpush1.bf16.msra.mxu0 0
        %834 = vmatprep.subr.bf16.mxu0 0
        %835 = vmatpush1.bf16.msra.mxu0 0
        %836 = vmatprep.subr.bf16.mxu0 0
        %837 = vmatpush1.bf16.msra.mxu0 0
        %838 = vmatprep.subr.bf16.mxu0 0
        %839 = vmatpush1.bf16.msra.mxu0 0
        %840 = vmatprep.subr.bf16.mxu0 0
        %841 = vmatpush1.bf16.msra.mxu0 0
        %842 = vmatprep.subr.bf16.mxu0 0
        %843 = vmatpush1.bf16.msra.mxu0 0
        %844 = vmatprep.subr.bf16.mxu0 0
        %845 = vmatpush1.bf16.msra.mxu0 0
        %846 = vmatprep.subr.bf16.mxu0 0
        %847 = vmatpush1.bf16.msra.mxu0 0
        %848 = vmatprep.mubr.bf16.mxu0 0
        %849 = vmatmul.mubr.bf16.gmra.mrb[0].mxu0 %v815
        %v850 = vpop.f32.mrb[0].mxu0
        %v851 = vadd.f32 0.0, %v850
        %v852 = vpop.f32.mrb[0].mxu0
        %v853 = vadd.f32 0.0, %v852
        %v854 = vpop.f32.mrb[0].mxu0
        %v855 = vpop.f32.mrb[0].mxu0
        %856 = vdwg.mxu0
        %857 = vmatprep.subr.bf16.mxu0 0
        %858 = vmatpush1.bf16.msra.mxu0 %v550
        %859 = vmatprep.subr.bf16.mxu0 0
        %860 = vmatpush1.bf16.msra.mxu0 %v553
        %861 = vmatprep.subr.bf16.mxu0 0
        %862 = vmatpush1.bf16.msra.mxu0 %v556
        %863 = vmatprep.subr.bf16.mxu0 0
        %864 = vmatpush1.bf16.msra.mxu0 %v559
        %865 = vmatprep.subr.bf16.mxu0 0
        %866 = vmatpush1.bf16.msra.mxu0 %v562
        %867 = vmatprep.subr.bf16.mxu0 0
        %868 = vmatpush1.bf16.msra.mxu0 %v565
        %869 = vmatprep.subr.bf16.mxu0 0
        %870 = vmatpush1.bf16.msra.mxu0 %v568
        %871 = vmatprep.subr.bf16.mxu0 0
        %872 = vmatpush1.bf16.msra.mxu0 %v571
        %873 = vmatprep.subr.bf16.mxu0 0
        %874 = vmatpush1.bf16.msra.mxu0 0
        %875 = vmatprep.subr.bf16.mxu0 0
        %876 = vmatpush1.bf16.msra.mxu0 0
        %877 = vmatprep.subr.bf16.mxu0 0
        %878 = vmatpush1.bf16.msra.mxu0 0
        %879 = vmatprep.subr.bf16.mxu0 0
        %880 = vmatpush1.bf16.msra.mxu0 0
        %881 = vmatprep.subr.bf16.mxu0 0
        %882 = vmatpush1.bf16.msra.mxu0 0
        %883 = vmatprep.subr.bf16.mxu0 0
        %884 = vmatpush1.bf16.msra.mxu0 0
        %885 = vmatprep.subr.bf16.mxu0 0
        %886 = vmatpush1.bf16.msra.mxu0 0
        %887 = vmatprep.subr.bf16.mxu0 0
        %888 = vmatpush1.bf16.msra.mxu0 0
        %889 = vmatprep.mubr.bf16.mxu0 0
        %890 = vmatmul.mubr.bf16.gmra.mrb[0].mxu0 %v815
        %v891 = vpop.f32.mrb[0].mxu0
        %v892 = vadd.f32 0.0, %v891
        %v893 = vpop.f32.mrb[0].mxu0
        %v894 = vpop.f32.mrb[0].mxu0
        %v895 = vpop.f32.mrb[0].mxu0
        %896 = vdwg.mxu0
        %v897 = vadd.f32 %v370, %v851
        %v898 = vxor.u32 %v897, 2147483648
        %v899 = vmul.f32 %v898, 1.442695
        %v900 = vpow.pop %v899
        %v901 = vadd.f32 %v900, 1.0
        %v902 = vrcp.pop %v901
        %v903 = vmul.f32 1.0, %v902
        %v904 = vadd.f32 %v372, %v853
        %v905 = vxor.u32 %v904, 2147483648
        %v906 = vmul.f32 %v905, 1.442695
        %v907 = vpow.pop %v906
        %v908 = vadd.f32 %v907, 1.0
        %v909 = vrcp.pop %v908
        %v910 = vmul.f32 1.0, %v909
        %v911 = vadd.f32 %v892, %v464
        %v912 = vmul.f32 %v903, %v911
        %v913 = vadd.f32 %v421, %v912
        %v914 = vtanh.pop %v913
        %v915 = vsub.f32 1.0, %v910
        %v916 = vmul.f32 %v915, %v914
        %v917 = vmul.f32 %v910, %v814
        %v918 = vadd.f32 %v916, %v917
        %s919 = sadd.s32 %s699, 2
        %p920 = scmp.lt.s32.totalorder %s919, 8
        %s921 = scalar_select %p920, 1, 0
        %v922 = vstv %s921
        %vm923 = vcmp.eq.s32.totalorder %v922, 1
        %v924 = vsel %vm923, %v918, %v814
        %v925 = vpack.c.bf16 %v924, %v924
        %926 = vmatprep.subr.bf16.mxu0 %v549
        %927 = vmatpush1.bf16.msra.mxu0 %v548
        %928 = vmatprep.subr.bf16.mxu0 %v552
        %929 = vmatpush1.bf16.msra.mxu0 %v551
        %930 = vmatprep.subr.bf16.mxu0 %v555
        %931 = vmatpush1.bf16.msra.mxu0 %v554
        %932 = vmatprep.subr.bf16.mxu0 %v558
        %933 = vmatpush1.bf16.msra.mxu0 %v557
        %934 = vmatprep.subr.bf16.mxu0 %v561
        %935 = vmatpush1.bf16.msra.mxu0 %v560
        %936 = vmatprep.subr.bf16.mxu0 %v564
        %937 = vmatpush1.bf16.msra.mxu0 %v563
        %938 = vmatprep.subr.bf16.mxu0 %v567
        %939 = vmatpush1.bf16.msra.mxu0 %v566
        %940 = vmatprep.subr.bf16.mxu0 %v570
        %941 = vmatpush1.bf16.msra.mxu0 %v569
        %942 = vmatprep.subr.bf16.mxu0 0
        %943 = vmatpush1.bf16.msra.mxu0 0
        %944 = vmatprep.subr.bf16.mxu0 0
        %945 = vmatpush1.bf16.msra.mxu0 0
        %946 = vmatprep.subr.bf16.mxu0 0
        %947 = vmatpush1.bf16.msra.mxu0 0
        %948 = vmatprep.subr.bf16.mxu0 0
        %949 = vmatpush1.bf16.msra.mxu0 0
        %950 = vmatprep.subr.bf16.mxu0 0
        %951 = vmatpush1.bf16.msra.mxu0 0
        %952 = vmatprep.subr.bf16.mxu0 0
        %953 = vmatpush1.bf16.msra.mxu0 0
        %954 = vmatprep.subr.bf16.mxu0 0
        %955 = vmatpush1.bf16.msra.mxu0 0
        %956 = vmatprep.subr.bf16.mxu0 0
        %957 = vmatpush1.bf16.msra.mxu0 0
        %958 = vmatprep.mubr.bf16.mxu0 0
        %959 = vmatmul.mubr.bf16.gmra.mrb[0].mxu0 %v925
        %v960 = vpop.f32.mrb[0].mxu0
        %v961 = vadd.f32 0.0, %v960
        %v962 = vpop.f32.mrb[0].mxu0
        %v963 = vadd.f32 0.0, %v962
        %v964 = vpop.f32.mrb[0].mxu0
        %v965 = vpop.f32.mrb[0].mxu0
        %966 = vdwg.mxu0
        %967 = vmatprep.subr.bf16.mxu0 0
        %968 = vmatpush1.bf16.msra.mxu0 %v550
        %969 = vmatprep.subr.bf16.mxu0 0
        %970 = vmatpush1.bf16.msra.mxu0 %v553
        %971 = vmatprep.subr.bf16.mxu0 0
        %972 = vmatpush1.bf16.msra.mxu0 %v556
        %973 = vmatprep.subr.bf16.mxu0 0
        %974 = vmatpush1.bf16.msra.mxu0 %v559
        %975 = vmatprep.subr.bf16.mxu0 0
        %976 = vmatpush1.bf16.msra.mxu0 %v562
        %977 = vmatprep.subr.bf16.mxu0 0
        %978 = vmatpush1.bf16.msra.mxu0 %v565
        %979 = vmatprep.subr.bf16.mxu0 0
        %980 = vmatpush1.bf16.msra.mxu0 %v568
        %981 = vmatprep.subr.bf16.mxu0 0
        %982 = vmatpush1.bf16.msra.mxu0 %v571
        %983 = vmatprep.subr.bf16.mxu0 0
        %984 = vmatpush1.bf16.msra.mxu0 0
        %985 = vmatprep.subr.bf16.mxu0 0
        %986 = vmatpush1.bf16.msra.mxu0 0
        %987 = vmatprep.subr.bf16.mxu0 0
        %988 = vmatpush1.bf16.msra.mxu0 0
        %989 = vmatprep.subr.bf16.mxu0 0
        %990 = vmatpush1.bf16.msra.mxu0 0
        %991 = vmatprep.subr.bf16.mxu0 0
        %992 = vmatpush1.bf16.msra.mxu0 0
        %993 = vmatprep.subr.bf16.mxu0 0
        %994 = vmatpush1.bf16.msra.mxu0 0
        %995 = vmatprep.subr.bf16.mxu0 0
        %996 = vmatpush1.bf16.msra.mxu0 0
        %997 = vmatprep.subr.bf16.mxu0 0
        %998 = vmatpush1.bf16.msra.mxu0 0
        %999 = vmatprep.mubr.bf16.mxu0 0
        %1000 = vmatmul.mubr.bf16.gmra.mrb[0].mxu0 %v925
        %v1001 = vpop.f32.mrb[0].mxu0
        %v1002 = vadd.f32 0.0, %v1001
        %v1003 = vpop.f32.mrb[0].mxu0
        %v1004 = vpop.f32.mrb[0].mxu0
        %v1005 = vpop.f32.mrb[0].mxu0
        %1006 = vdwg.mxu0
        %v1007 = vadd.f32 %v374, %v961
        %v1008 = vxor.u32 %v1007, 2147483648
        %v1009 = vmul.f32 %v1008, 1.442695
        %v1010 = vpow.pop %v1009
        %v1011 = vadd.f32 %v1010, 1.0
        %v1012 = vrcp.pop %v1011
        %v1013 = vmul.f32 1.0, %v1012
        %v1014 = vadd.f32 %v376, %v963
        %v1015 = vxor.u32 %v1014, 2147483648
        %v1016 = vmul.f32 %v1015, 1.442695
        %v1017 = vpow.pop %v1016
        %v1018 = vadd.f32 %v1017, 1.0
        %v1019 = vrcp.pop %v1018
        %v1020 = vmul.f32 1.0, %v1019
        %v1021 = vadd.f32 %v1002, %v464
        %v1022 = vmul.f32 %v1013, %v1021
        %v1023 = vadd.f32 %v424, %v1022
        %v1024 = vtanh.pop %v1023
        %v1025 = vsub.f32 1.0, %v1020
        %v1026 = vmul.f32 %v1025, %v1024
        %v1027 = vmul.f32 %v1020, %v924
        %v1028 = vadd.f32 %v1026, %v1027
        %s1029 = sadd.s32 %s699, 3
        %p1030 = scmp.lt.s32.totalorder %s1029, 8
        %s1031 = scalar_select %p1030, 1, 0
        %v1032 = vstv %s1031
        %vm1033 = vcmp.eq.s32.totalorder %v1032, 1
        %v1034 = vsel %vm1033, %v1028, %v924
        %1035 = vst [vmem:[#allocation8] sm:$0xff] %v1034
        // Predicated region
        $region57: #{tpu_custom_call.1} parent=39 // pred_check
          %p1036 = pneg %p144
        $region58: #{tpu_custom_call.1} parent=39 // pred_check_branch
          %1038 = sbr.rel (%p1036) target = $region60
        $region59: #{tpu_custom_call.1} parent=39 // pred_region
          %s1040 = ssub.s32 128, 128
          %1041 = vsyncadd [#allocation4], %s1040
          %s1043 = sshll.u32 [#allocation8], 4
          %s1044 = int_to_ptr.vmem [resolvable:$true] %s1043
          %1046 = dma.vmem_to_hbm [thread:$0]  %s1044, 128, %s5, [#allocation4]
        $region60: #{tpu_custom_call.1} parent=39 // pred_fallthru
          _
        // Predicated region
        $region61: #{tpu_custom_call.1} parent=39 // pred_check
          %p1047 = pneg %p144
        $region62: #{tpu_custom_call.1} parent=39 // pred_check_branch
          %1049 = sbr.rel (%p1047) target = $region64
        $region63: #{tpu_custom_call.1} parent=39 // pred_region
          %1050 = dma.done [#allocation4], 128
        $region64: #{tpu_custom_call.1} parent=39 // pred_fallthru
          _
      $region40: #{tpu_custom_call.1} parent=5 // pred_fallthru
        _
      %p1051 = scmp.le.s32.totalorder 2, %s16
      // Predicated region
      $region65: #{tpu_custom_call.1} parent=5 // pred_check
        %p1052 = pneg %p1051
      $region66: #{tpu_custom_call.1} parent=5 // pred_check_branch
        %1054 = sbr.rel (%p1052) target = $region68
      $region67: #{tpu_custom_call.1} parent=5 // pred_region
        %s1055 = ssub.s32 %s16, 2
      $region68: #{tpu_custom_call.1} parent=5 // pred_fallthru
        _
    $region6: #{tpu_custom_call.1} parent=1 // loop_footer
      %s20 = sadd.s32 1, %s16
    $region7: #{tpu_custom_call.1} parent=1 // loop_footer_branch
      %15 = sbr.rel target = $region3
    $region8: #{tpu_custom_call.1} parent=1 // loop_exit
      _
    %1056 = vsyncpa [#allocation3], 1
    %s1057 = scalar_lea.sflag [#allocation3], 1
    %1058 = vsyncpa %s1057, 1
    %1059 = vsyncpa [#allocation6], 1
    %1060 = vsyncpa [#allocation4], 1
    %s1061 = scalar_lea.sflag [#allocation4], 1
    %1062 = vsyncpa %s1061, 1

</llo_original>
